<compile_context>
chip_gen: v5e
topology: v5e:2x2
jax: 0.10.0
libtpu: 0.0.40
codegen_flags: <defaults>
</compile_context>

<pallas_src>
import functools

import jax
import jax.numpy as jnp
from jax.experimental import pallas as pl
from jax.experimental.pallas import tpu as pltpu


def _noisy_ce_kernel(p_ref, logits_ref, targets_ref, out_ref, *, n_total):
    p = p_ref[0, 0]                                   # f32 scalar from SMEM
    tgt = targets_ref[...]                            # (TM, 1) int32
    logits = logits_ref[...].astype(jnp.float32)      # (TM, C), upcast in-kernel
    tm, c = logits.shape

    # Target mask via lane-iota comparison (no gather, no float one-hot temp).
    col = jax.lax.broadcasted_iota(jnp.int32, (tm, c), 1)
    mask = col == tgt                                  # (TM, C) bool

    # Numerically stable per-row log-softmax cross entropy. The f32 copy of the
    # tile is fully consumed (max / masked-sum / shift) before the exp temporary
    # exists, keeping peak VMEM temporaries to ~2 (TM,C) f32 arrays.
    m = jnp.max(logits, axis=-1, keepdims=True)                          # (TM, 1)
    tgt_logit = jnp.sum(jnp.where(mask, logits, 0.0), axis=-1, keepdims=True)
    shifted = logits - m                               # last use of `logits`
    sum_exp = jnp.sum(jnp.exp(shifted), axis=-1, keepdims=True)
    lse = m + jnp.log(sum_exp)

    losses = lse - tgt_logit                                             # (TM, 1)

    # one_hot(targets, C).float().sum(1) == 1 iff target in [0, C), else 0.
    # The bounds check is numerically identical and avoids a (TM, C) select
    # plus a cross-lane (XLU) reduction.
    in_range = ((tgt >= 0) & (tgt < c)).astype(jnp.float32)              # (TM, 1)
    weights = (1.0 - p) + p * (1.0 - in_range)

    # Rows past N in the last partial tile read padding, which can give NaN/Inf
    # losses. jnp.where does NOT propagate NaN from the unselected branch, so
    # selecting (rather than multiplying by a 0/1 mask) zeroes them safely.
    row = jax.lax.broadcasted_iota(jnp.int32, (tm, 1), 0) + pl.program_id(0) * tm
    contrib = jnp.where(row < n_total, losses * weights, 0.0)

    # Lane-dense per-tile partial sum (unmasked full-vreg store).
    out_ref[...] = jnp.full((1, 8, 128), jnp.sum(contrib), dtype=jnp.float32)


def _vmem_limit_bytes():
    """Generation-aware scoped-VMEM limit for this kernel."""
    try:
        cap = int(pltpu.get_tpu_info().vmem_capacity_bytes)
    except Exception:  # query unavailable -> assume the smallest (v7x per-TC 64 MiB)
        cap = 64 * 1024 * 1024
    if cap >= 100 * 1024 * 1024:        # v5e / v6e: 128 MiB physical
        return 64 * 1024 * 1024
    return 48 * 1024 * 1024             # v7x: 64 MiB per TensorCore, leave headroom


def _choose_tm(n, c, itemsize, vmem_limit):
    # Budget the whole per-step working set, not just the native-dtype pipeline
    # buffer: 2x double-buffered native tile + ~2.5 (TM, C) f32 temporaries
    # (upcast copy / shifted / exp) + mask  ->  ~(2*itemsize + 12) bytes/element.
    eff_bytes_per_elem = 2 * itemsize + 12
    budget = int(0.75 * vmem_limit)
    tm = budget // max(1, c * eff_bytes_per_elem)

    # Round to the dtype-native sublane multiple (8 f32, 16 bf16, 32 int8/fp8).
    sub = max(8, 32 // max(1, itemsize))
    tm = max(sub, (tm // sub) * sub)

    n_pad = pl.cdiv(n, sub) * sub
    tm = min(tm, n_pad)

    # Guarantee >= 2 grid steps when there is room: with a single step only one
    # TensorCore does work on v7x even though the axis is marked "parallel".
    if pl.cdiv(n, tm) < 2:
        tm_half = max(sub, pl.cdiv(pl.cdiv(n, 2), sub) * sub)
        tm = min(tm, tm_half)
    return int(tm)


def noisy_cross_entropy_loss(logits, targets, p_noisy, tm=None):
    """logits: (N, C) float (any float dtype), targets: (N,) int. Returns scalar f32."""
    n, c = logits.shape
    itemsize = jnp.dtype(logits.dtype).itemsize
    vmem_limit = _vmem_limit_bytes()
    if tm is None:
        tm = _choose_tm(n, c, itemsize, vmem_limit)
    num_tiles = pl.cdiv(n, tm)

    targets2d = targets.astype(jnp.int32).reshape(n, 1)
    p_arr = jnp.full((1, 1), p_noisy, dtype=jnp.float32)

    cost = pl.CostEstimate(
        flops=8 * n * c,
        transcendentals=n * c + n,
        bytes_accessed=n * c * itemsize + n * 4 + num_tiles * 8 * 128 * 4,
    )

    partials = pl.pallas_call(
        functools.partial(_noisy_ce_kernel, n_total=n),
        out_shape=jax.ShapeDtypeStruct((num_tiles, 8, 128), jnp.float32),
        grid=(num_tiles,),
        in_specs=[
            pl.BlockSpec(memory_space=pltpu.MemorySpace.SMEM),   # p_noisy scalar
            pl.BlockSpec((tm, c), lambda i: (i, 0)),             # logits tile
            pl.BlockSpec((tm, 1), lambda i: (i, 0)),             # targets tile
        ],
        out_specs=pl.BlockSpec((1, 8, 128), lambda i: (i, 0, 0)),
        compiler_params=pltpu.CompilerParams(
            dimension_semantics=("parallel",),   # independent tiles -> megacore
            vmem_limit_bytes=vmem_limit,
        ),
        cost_estimate=cost,
    )(p_arr, logits, targets2d)

    return jnp.sum(partials[:, 0, 0]) / jnp.float32(n)


def _reference(logits, targets, p_noisy):
    # Pure-JAX reference mirroring the PyTorch module.
    logits = logits.astype(jnp.float32)
    lse = jax.nn.logsumexp(logits, axis=1)
    tgt_logit = jnp.take_along_axis(logits, targets[:, None], axis=1)[:, 0]
    losses = lse - tgt_logit
    one_hot = jax.nn.one_hot(targets, logits.shape[1], dtype=jnp.float32)
    weights = 1.0 - p_noisy + p_noisy * (1.0 - one_hot.sum(axis=1))
    return jnp.mean(losses * weights)


if __name__ == "__main__":
    key = jax.random.PRNGKey(0)
    p_noisy = 0.2

    # Case 1: small shapes consistent with the module (batch=8, classes=32).
    k1, k2, k3, k4, k5, k6 = jax.random.split(key, 6)
    N1, C1 = 8, 32
    logits1 = jax.random.normal(k1, (N1, C1), dtype=jnp.float32)
    targets1 = jax.random.randint(k2, (N1,), 0, C1, dtype=jnp.int32)
    out1 = jax.block_until_ready(noisy_cross_entropy_loss(logits1, targets1, p_noisy))
    ref1 = _reference(logits1, targets1, p_noisy)
    assert jnp.allclose(out1, ref1, rtol=1e-5, atol=1e-5), (out1, ref1)

    # Case 2: non-divisible batch; auto tile choice forces >= 2 grid steps
    # (exercises row masking + cross-tile partial-sum reduction).
    N2, C2 = 13, 40
    logits2 = jax.random.normal(k3, (N2, C2), dtype=jnp.float32)
    targets2 = jax.random.randint(k4, (N2,), 0, C2, dtype=jnp.int32)
    out2 = jax.block_until_ready(noisy_cross_entropy_loss(logits2, targets2, p_noisy))
    ref2 = _reference(logits2, targets2, p_noisy)
    assert jnp.allclose(out2, ref2, rtol=1e-5, atol=1e-5), (out2, ref2)

    # Case 3: bf16 logits (exercises 16-row sublane rounding + in-kernel upcast).
    N3, C3 = 40, 128
    logits3 = jax.random.normal(k5, (N3, C3), dtype=jnp.bfloat16)
    targets3 = jax.random.randint(k6, (N3,), 0, C3, dtype=jnp.int32)
    out3 = jax.block_until_ready(noisy_cross_entropy_loss(logits3, targets3, p_noisy))
    ref3 = _reference(logits3, targets3, p_noisy)
    assert jnp.allclose(out3, ref3, rtol=1e-4, atol=1e-4), (out3, ref3)

    print("KERNEL_OK")
</pallas_src>

<mosaic_0001>
module attributes {stable_mosaic.version = 11 : i64} {
  func.func @_noisy_ce_kernel(%arg0: i32, %arg1: memref<1x1xf32, #tpu.memory_space<smem>>, %arg2: memref<8x32xf32, #tpu.memory_space<vmem>>, %arg3: memref<8x1xi32, #tpu.memory_space<vmem>>, %arg4: memref<1x8x128xf32, #tpu.memory_space<vmem>>) attributes {dimension_semantics = [#tpu.dimension_semantics<parallel>], iteration_bounds = array<i64: 1>, scalar_prefetch = 0 : i64, scratch_operands = 0 : i64, tpu.core_type = #tpu.core_type<tc>, window_params = [{transform_indices = @transform_0, window_bounds = array<i64: 1, 1>}, {transform_indices = @transform_1, window_bounds = array<i64: 8, 32>}, {transform_indices = @transform_2, window_bounds = array<i64: 8, 1>}, {transform_indices = @transform_3, window_bounds = array<i64: 1, 8, 128>}]} {
    %c0 = arith.constant 0 : index
    %c0_0 = arith.constant 0 : index
    %0 = memref.load %arg1[%c0, %c0_0] : memref<1x1xf32, #tpu.memory_space<smem>>
    %c0_1 = arith.constant 0 : index
    %c0_2 = arith.constant 0 : index
    %1 = vector.load %arg3[%c0_1, %c0_2] : memref<8x1xi32, #tpu.memory_space<vmem>>, vector<8x1xi32>
    %c0_3 = arith.constant 0 : index
    %c0_4 = arith.constant 0 : index
    %2 = vector.load %arg2[%c0_3, %c0_4] : memref<8x32xf32, #tpu.memory_space<vmem>>, vector<8x32xf32>
    %3 = tpu.iota {dimensions = array<i32: 1>} : vector<8x32xi32>
    %4 = vector.broadcast %1 : vector<8x1xi32> to vector<8x32xi32>
    %5 = arith.cmpi eq, %3, %4 : vector<8x32xi32>
    %cst = arith.constant dense<0xFF800000> : vector<8xf32>
    %6 = vector.multi_reduction <maximumf>, %2, %cst [1] : vector<8x32xf32> to vector<8xf32>
    %7 = vector.shape_cast %6 : vector<8xf32> to vector<8x1xf32>
    %cst_5 = arith.constant 0.000000e+00 : f32
    %8 = vector.broadcast %cst_5 : f32 to vector<8x32xf32>
    %9 = arith.select %5, %2, %8 : vector<8x32xi1>, vector<8x32xf32>
    %cst_6 = arith.constant dense<0.000000e+00> : vector<8xf32>
    %10 = vector.multi_reduction <add>, %9, %cst_6 [1] : vector<8x32xf32> to vector<8xf32>
    %11 = vector.shape_cast %10 : vector<8xf32> to vector<8x1xf32>
    %12 = vector.broadcast %7 : vector<8x1xf32> to vector<8x32xf32>
    %13 = arith.subf %2, %12 : vector<8x32xf32>
    %14 = math.exp %13 : vector<8x32xf32>
    %cst_7 = arith.constant dense<0.000000e+00> : vector<8xf32>
    %15 = vector.multi_reduction <add>, %14, %cst_7 [1] : vector<8x32xf32> to vector<8xf32>
    %16 = vector.shape_cast %15 : vector<8xf32> to vector<8x1xf32>
    %17 = math.log %16 : vector<8x1xf32>
    %18 = arith.addf %7, %17 : vector<8x1xf32>
    %19 = arith.subf %18, %11 : vector<8x1xf32>
    %c0_i32 = arith.constant 0 : i32
    %20 = vector.broadcast %c0_i32 : i32 to vector<8x1xi32>
    %21 = arith.cmpi sge, %1, %20 : vector<8x1xi32>
    %c32_i32 = arith.constant 32 : i32
    %22 = vector.broadcast %c32_i32 : i32 to vector<8x1xi32>
    %23 = arith.cmpi slt, %1, %22 : vector<8x1xi32>
    %24 = arith.andi %21, %23 : vector<8x1xi1>
    %25 = arith.extui %24 : vector<8x1xi1> to vector<8x1xi32>
    %26 = arith.sitofp %25 : vector<8x1xi32> to vector<8x1xf32>
    %cst_8 = arith.constant 1.000000e+00 : f32
    %27 = arith.subf %cst_8, %0 : f32
    %cst_9 = arith.constant 1.000000e+00 : f32
    %28 = vector.broadcast %cst_9 : f32 to vector<8x1xf32>
    %29 = arith.subf %28, %26 : vector<8x1xf32>
    %30 = vector.broadcast %0 : f32 to vector<8x1xf32>
    %31 = arith.mulf %30, %29 : vector<8x1xf32>
    %32 = vector.broadcast %27 : f32 to vector<8x1xf32>
    %33 = arith.addf %32, %31 : vector<8x1xf32>
    %34 = tpu.iota {dimensions = array<i32: 0>} : vector<8x1xi32>
    %c8_i32 = arith.constant 8 : i32
    %35 = arith.muli %arg0, %c8_i32 : i32
    %36 = vector.broadcast %35 : i32 to vector<8x1xi32>
    %37 = arith.addi %34, %36 : vector<8x1xi32>
    %c8_i32_10 = arith.constant 8 : i32
    %38 = vector.broadcast %c8_i32_10 : i32 to vector<8x1xi32>
    %39 = arith.cmpi slt, %37, %38 : vector<8x1xi32>
    %40 = arith.mulf %19, %33 : vector<8x1xf32>
    %cst_11 = arith.constant 0.000000e+00 : f32
    %41 = vector.broadcast %cst_11 : f32 to vector<8x1xf32>
    %42 = arith.select %39, %40, %41 : vector<8x1xi1>, vector<8x1xf32>
    %43 = vector.shape_cast %42 : vector<8x1xf32> to vector<1x8x1xf32>
    %cst_12 = arith.constant dense<0.000000e+00> : vector<1xf32>
    %44 = vector.multi_reduction <add>, %43, %cst_12 [1, 2] : vector<1x8x1xf32> to vector<1xf32>
    %45 = vector.shape_cast %44 : vector<1xf32> to vector<1x1x1xf32>
    %46 = vector.extract %45[0, 0, 0] : f32 from vector<1x1x1xf32>
    %47 = vector.broadcast %46 : f32 to vector<1x8x128xf32>
    %c0_13 = arith.constant 0 : index
    %c0_14 = arith.constant 0 : index
    %c0_15 = arith.constant 0 : index
    %48 = vector.load %arg4[%c0_13, %c0_14, %c0_15] : memref<1x8x128xf32, #tpu.memory_space<vmem>>, vector<1x8x128xf32>
    tpu.vector_store %arg4[%c0_13, %c0_14, %c0_15], %47 {strides = array<i32>} : memref<1x8x128xf32, #tpu.memory_space<vmem>>, vector<1x8x128xf32>,
    return
  }
  func.func @transform_0(%arg0: i32) -> (i32, i32) {
    %c0_i32 = arith.constant 0 : i32
    %c0_i32_0 = arith.constant 0 : i32
    %c0_i32_1 = arith.constant 0 : i32
    return %c0_i32, %c0_i32_0 : i32, i32
  }
  func.func @transform_1(%arg0: i32) -> (i32, i32) {
    %c0_i32 = arith.constant 0 : i32
    %c0_i32_0 = arith.constant 0 : i32
    return %arg0, %c0_i32 : i32, i32
  }
  func.func @transform_2(%arg0: i32) -> (i32, i32) {
    %c0_i32 = arith.constant 0 : i32
    %c0_i32_0 = arith.constant 0 : i32
    return %arg0, %c0_i32 : i32, i32
  }
  func.func @transform_3(%arg0: i32) -> (i32, i32, i32) {
    %c0_i32 = arith.constant 0 : i32
    %c0_i32_0 = arith.constant 0 : i32
    %c0_i32_1 = arith.constant 0 : i32
    return %arg0, %c0_i32, %c0_i32_0 : i32, i32, i32
  }
}

</mosaic_0001>

<llo_original>
// kernel: tpu_custom_call.1
$region0: #{tpu_custom_call.1}
  #allocation0 [shape = 'u32[]', space=smem, size = 0x4, offset = 0x4, fixed_abs, tag = 'smem constant byte address 0x4 - core index']
  #allocation1 [shape = 'u32[72,128]{1,0:T(1,128)}', space=vmem, size = 0x9000, scoped, tag = 'internal scratch']
  #allocation2 [shape = 'f32[1,1]{1,0:T(1,128)S(6)}', space=smem, size = 0x200, scoped, tag = 'scoped memory for tpu_custom_call.1']
  %s0 = inlined_call_operand.<no memory space> [shape: f32[1,1], index: 0, kind: input, shape index: {}]
  %s1 = inlined_call_operand.vmem [shape: f32[8,32], index: 1, kind: input, shape index: {}]
  %s2 = inlined_call_operand.vmem [shape: s32[8,1], index: 2, kind: input, shape index: {}]
  %s3 = inlined_call_operand.hbm [shape: f32[1,8,128], index: 3, kind: output, shape index: {}]
  %s4 = sld [smem:[#allocation0]]
  $region22: #{tpu_custom_call.1} parent=0
    _
  %s6 = ssub.s32 1, %s4
  %s7 = scalar_select 0, %s6, %s4
  %8 = sst [smem:[#allocation2]] %s0
  $region1: #{tpu_custom_call.1} parent=0
    #allocation3 [shape = 'u8[4096]{0}', space=vmem, size = 0x1000, scoped, tag = 'output window, operand 0, single buffered']
    #allocation4 [shape = 's32[1]{0}', space=sflag, size = 0x4, scoped, tag = 'scoped memory for tpu_custom_call.1']
    %9 = vsyncpa [#allocation4], 0
    // Predicated region
    $region2: #{tpu_custom_call.1} parent=1 // pred_check
      _
    $region3: #{tpu_custom_call.1} parent=1 // pred_check_branch
      %11 = sbr.rel (0) target = $region5
    $region4: #{tpu_custom_call.1} parent=1 // pred_region
      _
    $region5: #{tpu_custom_call.1} parent=1 // pred_fallthru
      _
    // Predicated region
    $region6: #{tpu_custom_call.1} parent=1 // pred_check
      _
    $region7: #{tpu_custom_call.1} parent=1 // pred_check_branch
      %13 = sbr.rel (0) target = $region9
    $region8: #{tpu_custom_call.1} parent=1 // pred_region
      _
    $region9: #{tpu_custom_call.1} parent=1 // pred_fallthru
      _
    // Predicated region
    $region10: #{tpu_custom_call.1} parent=1 // pred_check
      _
    $region11: #{tpu_custom_call.1} parent=1 // pred_check_branch
      %15 = sbr.rel (0) target = $region13
    $region12: #{tpu_custom_call.1} parent=1 // pred_region
      _
    $region13: #{tpu_custom_call.1} parent=1 // pred_fallthru
      _
    %s16 = sld [smem:[#allocation2]]
    %v17 = vld [vmem:[%s2] sm:$0xff]
    %v18 = vld [vmem:[%s1] sm:$0xff]
    %v19 = vlaneseq
    %v20 = vand.u32 %v19, 127
    %21 = vset.pattern.permute.xlu0 0
    %22 = vperm.xlu0 %21, %v17
    %v23 = vpop.permute.xlu0 %22
    %vm24 = vcmp.eq.s32.totalorder %v20, %v23
    %vm25 = vcmask 261120
    %v26 = vsel %vm25, %v18, -inf
    %27 = vmax.xlane.f32.xlu0 %v26
    %v28 = vpop.xlane.xlu0 %27
    %v29 = vsel %vm24, %v18, 0.0
    %v30 = vsel %vm25, %v29, 0.0
    %31 = vadd.xlane.f32.xlu0 %v30
    %v32 = vpop.xlane.xlu0 %31
    %v33 = vsub.f32 %v18, %v28
    %v34 = vmul.f32 %v33, 1.442695
    %v35 = vpow.pop %v34
    %v36 = vsel %vm25, %v35, 0.0
    %37 = vadd.xlane.f32.xlu0 %v36
    %v38 = vpop.xlane.xlu0 %37
    %v39 = vlog2.pop %v38
    %v40 = vmul.f32 %v39, 0.6931472
    %v41 = vadd.f32 %v28, %v40
    %v42 = vsub.f32 %v41, %v32
    %vm43 = vcmp.ge.s32.totalorder %v17, 0
    %vm44 = vcmp.lt.s32.totalorder %v17, 32
    %vm45 = vmand %vm43, %vm44
    %v46 = vsel %vm45, 1, 0
    %v47 = vcvt.s32.f32 %v46
    %s48 = ssub.f32 1.0, %s16
    %v49 = vsub.f32 1.0, %v47
    %v50 = vstv %s16
    %v51 = vmul.f32 %v50, %v49
    %v52 = vstv %s48
    %v53 = vadd.f32 %v52, %v51
    %v54 = vlaneseq
    %v55 = vshrl.u32 %v54, 7
    %s56 = smul.u32 0, 8
    %v57 = vstv %s56
    %v58 = vadd.s32 %v55, %v57
    %vm59 = vcmp.lt.s32.totalorder %v58, 8
    %v60 = vmul.f32 %v42, %v53
    %v61 = vsel %vm59, %v60, 0.0
    %vm62 = vcmask 7168
    %v63 = vsel %vm62, %v61, 0.0
    %64 = vadd.xlane.f32.xlu0 %v63
    %v65 = vpop.xlane.xlu0 %64
    %v66 = vrot.slane %v65, 4
    %v67 = vadd.f32 %v65, %v66
    %v68 = vrot.slane %v67, 2
    %v69 = vadd.f32 %v67, %v68
    %v70 = vrot.slane %v69, 1
    %v71 = vadd.f32 %v69, %v70
    %s72 = vtos %v71
    %v73 = vstv %s72
    %74 = vst [vmem:[#allocation3] sm:$0xff] %v73
    // Predicated region
    $region14: #{tpu_custom_call.1} parent=1 // pred_check
      _
    $region15: #{tpu_custom_call.1} parent=1 // pred_check_branch
      %76 = sbr.rel (0) target = $region17
    $region16: #{tpu_custom_call.1} parent=1 // pred_region
      %78 = vsyncadd [#allocation4], 0
      %s80 = sshll.u32 [#allocation3], 4
      %s81 = int_to_ptr.vmem [resolvable:$true] %s80
      %s82 = sshll.u32 %s3, 4
      %s83 = int_to_ptr.hbm [resolvable:$true] %s82
      %85 = dma.vmem_to_hbm [thread:$0]  %s81, 128, %s83, [#allocation4]
    $region17: #{tpu_custom_call.1} parent=1 // pred_fallthru
      _
    // Predicated region
    $region18: #{tpu_custom_call.1} parent=1 // pred_check
      _
    $region19: #{tpu_custom_call.1} parent=1 // pred_check_branch
      %87 = sbr.rel (0) target = $region21
    $region20: #{tpu_custom_call.1} parent=1 // pred_region
      %89 = dma.done [#allocation4], 128
    $region21: #{tpu_custom_call.1} parent=1 // pred_fallthru
      _
    %90 = vsyncpa [#allocation4], 1

</llo_original>
